<compile_context>
chip_gen: v6e
topology: v6e:2x2x1
jax: 0.10.0
libtpu: 0.0.40
codegen_flags: <defaults>
</compile_context>

<pallas_src>
import jax
import jax.numpy as jnp
from jax.experimental import pallas as pl
from jax.experimental.pallas import tpu as pltpu

# Below this many elements, plain XLA fusion beats a kernel launch.
_MIN_PALLAS_ELEMS = 64 * 1024
# Target per-grid-step unique HBM traffic (read + all writes), in bytes.
_TARGET_STEP_BYTES = 8 * 1024 * 1024
# Don't shrink steps below this much traffic just to lengthen the grid.
_MIN_STEP_BYTES = 512 * 1024
# Prefer at least this many grid steps (pipelining + 2 cores on v7x).
_MIN_GRID_STEPS = 8
# Explicit scoped-VMEM budget: >= 2x the largest per-stage footprint (~8 MiB),
# within v7x's physical 64 MiB and raising v5e's 16 MiB default.
_VMEM_LIMIT_BYTES = 32 * 1024 * 1024


def _fused_split_add_kernel(x_ref, cat_ref, s0_ref, s1_ref, s2_ref):
    # x block: (tn, 3, th, W).  concat of (split1[i] + split2[i]) == 2 * x.
    x = x_ref[...]
    cat_ref[...] = x + x
    # Channel splits: channel is a major dim here, so these slices are free
    # (no cross-lane/sublane movement) and the stores are dense.
    s0_ref[...] = x[:, 0:1]
    s1_ref[...] = x[:, 1:2]
    s2_ref[...] = x[:, 2:3]


def _pick_tiles(n, h, w, itemsize):
    """Choose (tn, th): batch-tile and H-tile.  W stays full (lane-dense and
    always layout-legal since it equals the array dim).  Per step we move
    tn*th rows of all-channel data; 1 row costs 9*w*itemsize bytes of traffic
    (1x read + 1x concat write + 1x split writes)."""
    bytes_per_row = 9 * w * itemsize
    rows_budget = max(1, _TARGET_STEP_BYTES // bytes_per_row)

    if rows_budget >= h:
        th = h
        tn = max(1, min(n, rows_budget // h))
    else:
        tn = 1
        if h <= 8:
            th = h
        else:
            th = min(h, max(8, (rows_budget // 8) * 8))  # multiple of 8

    # Lengthen the grid (better pipelining, both v7x cores busy) as long as
    # each step still carries a worthwhile amount of traffic.
    while pl.cdiv(n, tn) * pl.cdiv(h, th) < _MIN_GRID_STEPS:
        new_tn, new_th = tn, th
        if tn > 1:
            new_tn = max(1, tn // 2)
        elif th > 8:
            new_th = max(8, ((th // 2 + 7) // 8) * 8)
            if new_th >= th:
                break
        else:
            break
        if new_tn * new_th * bytes_per_row < _MIN_STEP_BYTES:
            break
        tn, th = new_tn, new_th

    return tn, th


@jax.jit
def model_forward(v1):
    """Returns (concatenated_tensor, (c0, c1, c2)) matching the PyTorch module."""
    n, c, h, w = v1.shape
    assert c == 3, "torch.split(v1, [1,1,1], dim=1) requires 3 channels"
    total = n * c * h * w

    if total < _MIN_PALLAS_ELEMS:
        # Tiny inputs: let XLA fuse — kernel overhead dominates.
        concatenated = v1 + v1
        splits = tuple(v1[:, i:i + 1, :, :] for i in range(3))
        return concatenated, splits

    tn, th = _pick_tiles(n, h, w, v1.dtype.itemsize)
    grid = (pl.cdiv(n, tn), pl.cdiv(h, th))  # ragged last blocks are fine

    cat, s0, s1, s2 = pl.pallas_call(
        _fused_split_add_kernel,
        out_shape=(
            jax.ShapeDtypeStruct((n, 3, h, w), v1.dtype),
            jax.ShapeDtypeStruct((n, 1, h, w), v1.dtype),
            jax.ShapeDtypeStruct((n, 1, h, w), v1.dtype),
            jax.ShapeDtypeStruct((n, 1, h, w), v1.dtype),
        ),
        grid=grid,
        in_specs=[pl.BlockSpec((tn, 3, th, w), lambda i, j: (i, 0, j, 0))],
        out_specs=(
            pl.BlockSpec((tn, 3, th, w), lambda i, j: (i, 0, j, 0)),
            pl.BlockSpec((tn, 1, th, w), lambda i, j: (i, 0, j, 0)),
            pl.BlockSpec((tn, 1, th, w), lambda i, j: (i, 0, j, 0)),
            pl.BlockSpec((tn, 1, th, w), lambda i, j: (i, 0, j, 0)),
        ),
        compiler_params=pltpu.CompilerParams(
            dimension_semantics=("parallel", "parallel"),
            vmem_limit_bytes=_VMEM_LIMIT_BYTES,
        ),
    )(v1)

    return cat, (s0, s1, s2)


if __name__ == "__main__":
    key = jax.random.PRNGKey(0)

    # Pallas path: channels=3 (required by split([1,1,1])); this shape yields a
    # multi-step (parallel, parallel) grid with dense 4D tiles.
    x = jax.random.normal(key, (2, 3, 128, 256), dtype=jnp.float32)
    concat, splits = model_forward(x)
    concat = jax.block_until_ready(concat)
    splits = jax.block_until_ready(splits)

    assert concat.shape == x.shape
    assert jnp.allclose(concat, 2.0 * x, atol=1e-6)
    assert len(splits) == 3
    for i in range(3):
        assert splits[i].shape == (2, 1, 128, 256)
        assert jnp.allclose(splits[i], x[:, i:i + 1, :, :])

    # Tiny-input path (no Pallas, XLA fuses) — correctness only.
    x_small = jax.random.normal(jax.random.PRNGKey(1), (2, 3, 16, 16),
                                dtype=jnp.float32)
    c_small, s_small = model_forward(x_small)
    jax.block_until_ready((c_small, s_small))
    assert jnp.allclose(c_small, 2.0 * x_small, atol=1e-6)
    for i in range(3):
        assert jnp.allclose(s_small[i], x_small[:, i:i + 1, :, :])

    print("KERNEL_OK")
</pallas_src>

<mosaic_0001>
module attributes {stable_mosaic.version = 11 : i64} {
  func.func @_fused_split_add_kernel(%arg0: i32, %arg1: i32, %arg2: memref<1x3x64x256xf32, #tpu.memory_space<vmem>>, %arg3: memref<1x3x64x256xf32, #tpu.memory_space<vmem>>, %arg4: memref<1x1x64x256xf32, #tpu.memory_space<vmem>>, %arg5: memref<1x1x64x256xf32, #tpu.memory_space<vmem>>, %arg6: memref<1x1x64x256xf32, #tpu.memory_space<vmem>>) attributes {dimension_semantics = [#tpu.dimension_semantics<parallel>, #tpu.dimension_semantics<parallel>], iteration_bounds = array<i64: 2, 2>, scalar_prefetch = 0 : i64, scratch_operands = 0 : i64, tpu.core_type = #tpu.core_type<tc>, window_params = [{transform_indices = @transform_0, window_bounds = array<i64: 1, 3, 64, 256>}, {transform_indices = @transform_1, window_bounds = array<i64: 1, 3, 64, 256>}, {transform_indices = @transform_2, window_bounds = array<i64: 1, 1, 64, 256>}, {transform_indices = @transform_3, window_bounds = array<i64: 1, 1, 64, 256>}, {transform_indices = @transform_4, window_bounds = array<i64: 1, 1, 64, 256>}]} {
    %c0 = arith.constant 0 : index
    %c0_0 = arith.constant 0 : index
    %c0_1 = arith.constant 0 : index
    %c0_2 = arith.constant 0 : index
    %0 = vector.load %arg2[%c0, %c0_0, %c0_1, %c0_2] : memref<1x3x64x256xf32, #tpu.memory_space<vmem>>, vector<1x3x64x256xf32>
    %1 = arith.addf %0, %0 : vector<1x3x64x256xf32>
    %c0_3 = arith.constant 0 : index
    %c0_4 = arith.constant 0 : index
    %c0_5 = arith.constant 0 : index
    %c0_6 = arith.constant 0 : index
    %2 = vector.load %arg3[%c0_3, %c0_4, %c0_5, %c0_6] : memref<1x3x64x256xf32, #tpu.memory_space<vmem>>, vector<1x3x64x256xf32>
    tpu.vector_store %arg3[%c0_3, %c0_4, %c0_5, %c0_6], %1 {strides = array<i32>} : memref<1x3x64x256xf32, #tpu.memory_space<vmem>>, vector<1x3x64x256xf32>,
    %3 = vector.extract_strided_slice %0 {offsets = [0, 0, 0, 0], sizes = [1, 1, 64, 256], strides = [1, 1, 1, 1]} : vector<1x3x64x256xf32> to vector<1x1x64x256xf32>
    %c0_7 = arith.constant 0 : index
    %c0_8 = arith.constant 0 : index
    %c0_9 = arith.constant 0 : index
    %c0_10 = arith.constant 0 : index
    %4 = vector.load %arg4[%c0_7, %c0_8, %c0_9, %c0_10] : memref<1x1x64x256xf32, #tpu.memory_space<vmem>>, vector<1x1x64x256xf32>
    tpu.vector_store %arg4[%c0_7, %c0_8, %c0_9, %c0_10], %3 {strides = array<i32>} : memref<1x1x64x256xf32, #tpu.memory_space<vmem>>, vector<1x1x64x256xf32>,
    %5 = vector.extract_strided_slice %0 {offsets = [0, 1, 0, 0], sizes = [1, 1, 64, 256], strides = [1, 1, 1, 1]} : vector<1x3x64x256xf32> to vector<1x1x64x256xf32>
    %c0_11 = arith.constant 0 : index
    %c0_12 = arith.constant 0 : index
    %c0_13 = arith.constant 0 : index
    %c0_14 = arith.constant 0 : index
    %6 = vector.load %arg5[%c0_11, %c0_12, %c0_13, %c0_14] : memref<1x1x64x256xf32, #tpu.memory_space<vmem>>, vector<1x1x64x256xf32>
    tpu.vector_store %arg5[%c0_11, %c0_12, %c0_13, %c0_14], %5 {strides = array<i32>} : memref<1x1x64x256xf32, #tpu.memory_space<vmem>>, vector<1x1x64x256xf32>,
    %7 = vector.extract_strided_slice %0 {offsets = [0, 2, 0, 0], sizes = [1, 1, 64, 256], strides = [1, 1, 1, 1]} : vector<1x3x64x256xf32> to vector<1x1x64x256xf32>
    %c0_15 = arith.constant 0 : index
    %c0_16 = arith.constant 0 : index
    %c0_17 = arith.constant 0 : index
    %c0_18 = arith.constant 0 : index
    %8 = vector.load %arg6[%c0_15, %c0_16, %c0_17, %c0_18] : memref<1x1x64x256xf32, #tpu.memory_space<vmem>>, vector<1x1x64x256xf32>
    tpu.vector_store %arg6[%c0_15, %c0_16, %c0_17, %c0_18], %7 {strides = array<i32>} : memref<1x1x64x256xf32, #tpu.memory_space<vmem>>, vector<1x1x64x256xf32>,
    return
  }
  func.func @transform_0(%arg0: i32, %arg1: i32) -> (i32, i32, i32, i32) {
    %c0_i32 = arith.constant 0 : i32
    %c0_i32_0 = arith.constant 0 : i32
    %c0_i32_1 = arith.constant 0 : i32
    return %arg0, %c0_i32, %arg1, %c0_i32_0 : i32, i32, i32, i32
  }
  func.func @transform_1(%arg0: i32, %arg1: i32) -> (i32, i32, i32, i32) {
    %c0_i32 = arith.constant 0 : i32
    %c0_i32_0 = arith.constant 0 : i32
    %c0_i32_1 = arith.constant 0 : i32
    return %arg0, %c0_i32, %arg1, %c0_i32_0 : i32, i32, i32, i32
  }
  func.func @transform_2(%arg0: i32, %arg1: i32) -> (i32, i32, i32, i32) {
    %c0_i32 = arith.constant 0 : i32
    %c0_i32_0 = arith.constant 0 : i32
    %c0_i32_1 = arith.constant 0 : i32
    return %arg0, %c0_i32, %arg1, %c0_i32_0 : i32, i32, i32, i32
  }
  func.func @transform_3(%arg0: i32, %arg1: i32) -> (i32, i32, i32, i32) {
    %c0_i32 = arith.constant 0 : i32
    %c0_i32_0 = arith.constant 0 : i32
    %c0_i32_1 = arith.constant 0 : i32
    return %arg0, %c0_i32, %arg1, %c0_i32_0 : i32, i32, i32, i32
  }
  func.func @transform_4(%arg0: i32, %arg1: i32) -> (i32, i32, i32, i32) {
    %c0_i32 = arith.constant 0 : i32
    %c0_i32_0 = arith.constant 0 : i32
    %c0_i32_1 = arith.constant 0 : i32
    return %arg0, %c0_i32, %arg1, %c0_i32_0 : i32, i32, i32, i32
  }
}

</mosaic_0001>

<llo_original>
// kernel: model_forward.1
$region0: #{model_forward.1}
  #allocation0 [shape = 'u32[]', space=smem, size = 0x4, offset = 0x4, fixed_abs, tag = 'smem constant byte address 0x4 - core index']
  #allocation1 [shape = 'u32[144,128]{1,0:T(1,128)}', space=vmem, size = 0x12000, scoped, tag = 'internal scratch']
  #allocation11 [shape = 's32[]', space=sflag, size = 0x4, offset = 0, fixed_abs, tag = 'sflag constant byte address 0x0 - dummy sync flag']
  #allocation13 [shape = 's32[]', space=sflag, size = 0x4, offset = 0, fixed_abs, tag = 'sflag constant byte address 0x0 - dummy sync flag']
  %s0 = inlined_call_operand.hbm [shape: f32[2,3,128,256], index: 0, kind: input, shape index: {}]
  %s1 = inlined_call_operand.hbm [shape: f32[2,3,128,256], index: 1, kind: output, shape index: {0}]
  %s2 = inlined_call_operand.hbm [shape: f32[2,1,128,256], index: 2, kind: output, shape index: {1}]
  %s3 = inlined_call_operand.hbm [shape: f32[2,1,128,256], index: 3, kind: output, shape index: {2}]
  %s4 = inlined_call_operand.hbm [shape: f32[2,1,128,256], index: 4, kind: output, shape index: {3}]
  %5 = xla_tuple %s1, %s2, %s3, %s4
  %s6 = sld [smem:[#allocation0]]
  $region65: #{model_forward.1} parent=0
    _
  %s8 = ssub.s32 1, %s6
  %s9 = scalar_select 0, %s8, %s6
  $region1: #{model_forward.1} parent=0
    #allocation2 [shape = 'u8[393216]{0}', space=vmem, size = 0x60000, scoped, tag = 'input window, operand 0']
    #allocation3 [shape = 's32[2]{0}', space=sflag, size = 0x8, scoped, tag = 'scoped memory for model_forward.1']
    #allocation4 [shape = 's32[2]{0}', space=sflag, size = 0x8, scoped, tag = 'scoped memory for model_forward.1']
    #allocation5 [shape = 'u8[393216]{0}', space=vmem, size = 0x60000, scoped, tag = 'output window, operand 0']
    #allocation6 [shape = 'u8[131072]{0}', space=vmem, size = 0x20000, scoped, tag = 'output window, operand 1']
    #allocation7 [shape = 's32[2]{0}', space=sflag, size = 0x8, scoped, tag = 'scoped memory for model_forward.1']
    #allocation8 [shape = 'u8[131072]{0}', space=vmem, size = 0x20000, scoped, tag = 'output window, operand 2']
    #allocation9 [shape = 'u8[131072]{0}', space=vmem, size = 0x20000, scoped, tag = 'output window, operand 3']
    #allocation10 [shape = 's32[2]{0}', space=sflag, size = 0x8, scoped, tag = 'scoped memory for model_forward.1']
    %10 = vsyncpa [#allocation3], 0
    %s11 = scalar_lea.sflag [#allocation3], 1
    %12 = vsyncpa %s11, 0
    %13 = vsyncpa [#allocation4], 0
    %s14 = scalar_lea.sflag [#allocation4], 1
    %15 = vsyncpa %s14, 0
    %16 = vsyncpa [#allocation7], 0
    %s17 = scalar_lea.sflag [#allocation7], 1
    %18 = vsyncpa %s17, 0
    %19 = vsyncpa [#allocation10], 0
    %s20 = scalar_lea.sflag [#allocation10], 1
    %21 = vsyncpa %s20, 0
    loop: start=0, step=1, limit=6
    $region2: #{model_forward.1} parent=1 // loop_pre_header
      _
    $region3: #{model_forward.1} parent=1 // loop_header
      %s23 = sphi 0, %s27
      %p24 = scmp.ge.s32.totalorder %s23, 6
      %s30 = sphi 0, %s42
      %s31 = sphi 0, %s38
      %s32 = sphi 0, %s30
      %s33 = sphi 0, %s31
      %s34 = sphi 0, %s32
      %s35 = sphi 0, %s33
      %s47 = sphi 0, %s49
      %s50 = sphi 0, %s47
      %s51 = sphi 0, %s50
      %s67 = sphi 0, %s51
      %s75 = sphi 0, %s77
      %s78 = sphi 0, %s75
      %s79 = sphi 0, %s78
      %s95 = sphi 0, %s79
      %s103 = sphi 0, %s105
      %s106 = sphi 0, %s103
      %s107 = sphi 0, %s106
      %s123 = sphi 0, %s107
      %s131 = sphi 0, %s133
      %s134 = sphi 0, %s131
      %s135 = sphi 0, %s134
      %s151 = sphi 0, %s135
      %s159 = sphi 0, %s161
      %s162 = sphi 0, %s159
      %s163 = sphi 0, %s162
      %s179 = sphi 0, %s163
    $region4: #{model_forward.1} parent=1 // loop_header_branch
      %26 = sbr.rel (%p24) target = $region8
    $region5: #{model_forward.1} parent=1 // loop_body
      %s28 = ssub.s32 %s23, 1
      %s29 = ssub.s32 %s23, 2
      %s36 = sadd.s32 1, %s31
      %p37 = scmp.ge.s32.totalorder %s36, 2
      %s38 = scalar_select %p37, 0, %s36
      %s39 = sadd.s32 1, %s30
      %s40 = scalar_select %p37, %s39, %s30
      %p41 = scmp.ge.s32.totalorder %s40, 2
      %s42 = scalar_select %p41, 0, %s40
      %s43 = ssub.s32 %s30, %s42
      %s44 = ssub.s32 %s31, %s38
      %s45 = sor.u32 %s43, %s44
      %p46 = scmp.eq.s32.totalorder %s45, 0
      %s48 = sadd.s32 %s47, 1
      %s49 = scalar_select %p46, %s47, %s48
      %p52 = pneg %p46
      %p53 = scmp.eq.s32.totalorder %s23, 3
      %p54 = por %p52, %p53
      %p55 = scmp.ne.s32.totalorder %s47, %s50
      %p56 = scmp.eq.s32.totalorder %s23, 0
      %p57 = por %p55, %p56
      %p58 = scmp.ne.s32.totalorder %s47, %s50
      %p59 = scmp.eq.s32.totalorder %s28, 3
      %p60 = por %p58, %p59
      %p61 = scmp.ne.s32.totalorder %s50, %s51
      %p62 = scmp.eq.s32.totalorder %s28, 0
      %p63 = por %p61, %p62
      %p64 = scmp.ne.s32.totalorder %s50, %s51
      %p65 = scmp.eq.s32.totalorder %s29, 3
      %p66 = por %p64, %p65
      %p68 = scmp.ne.s32.totalorder %s51, %s67
      %p69 = scmp.eq.s32.totalorder %s29, 0
      %p70 = por %p68, %p69
      %s71 = ssub.s32 %s30, %s42
      %s72 = ssub.s32 %s31, %s38
      %s73 = sor.u32 %s71, %s72
      %p74 = scmp.eq.s32.totalorder %s73, 0
      %s76 = sadd.s32 %s75, 1
      %s77 = scalar_select %p74, %s75, %s76
      %p80 = pneg %p74
      %p81 = scmp.eq.s32.totalorder %s23, 3
      %p82 = por %p80, %p81
      %p83 = scmp.ne.s32.totalorder %s75, %s78
      %p84 = scmp.eq.s32.totalorder %s23, 0
      %p85 = por %p83, %p84
      %p86 = scmp.ne.s32.totalorder %s75, %s78
      %p87 = scmp.eq.s32.totalorder %s28, 3
      %p88 = por %p86, %p87
      %p89 = scmp.ne.s32.totalorder %s78, %s79
      %p90 = scmp.eq.s32.totalorder %s28, 0
      %p91 = por %p89, %p90
      %p92 = scmp.ne.s32.totalorder %s78, %s79
      %p93 = scmp.eq.s32.totalorder %s29, 3
      %p94 = por %p92, %p93
      %p96 = scmp.ne.s32.totalorder %s79, %s95
      %p97 = scmp.eq.s32.totalorder %s29, 0
      %p98 = por %p96, %p97
      %s99 = ssub.s32 %s30, %s42
      %s100 = ssub.s32 %s31, %s38
      %s101 = sor.u32 %s99, %s100
      %p102 = scmp.eq.s32.totalorder %s101, 0
      %s104 = sadd.s32 %s103, 1
      %s105 = scalar_select %p102, %s103, %s104
      %p108 = pneg %p102
      %p109 = scmp.eq.s32.totalorder %s23, 3
      %p110 = por %p108, %p109
      %p111 = scmp.ne.s32.totalorder %s103, %s106
      %p112 = scmp.eq.s32.totalorder %s23, 0
      %p113 = por %p111, %p112
      %p114 = scmp.ne.s32.totalorder %s103, %s106
      %p115 = scmp.eq.s32.totalorder %s28, 3
      %p116 = por %p114, %p115
      %p117 = scmp.ne.s32.totalorder %s106, %s107
      %p118 = scmp.eq.s32.totalorder %s28, 0
      %p119 = por %p117, %p118
      %p120 = scmp.ne.s32.totalorder %s106, %s107
      %p121 = scmp.eq.s32.totalorder %s29, 3
      %p122 = por %p120, %p121
      %p124 = scmp.ne.s32.totalorder %s107, %s123
      %p125 = scmp.eq.s32.totalorder %s29, 0
      %p126 = por %p124, %p125
      %s127 = ssub.s32 %s30, %s42
      %s128 = ssub.s32 %s31, %s38
      %s129 = sor.u32 %s127, %s128
      %p130 = scmp.eq.s32.totalorder %s129, 0
      %s132 = sadd.s32 %s131, 1
      %s133 = scalar_select %p130, %s131, %s132
      %p136 = pneg %p130
      %p137 = scmp.eq.s32.totalorder %s23, 3
      %p138 = por %p136, %p137
      %p139 = scmp.ne.s32.totalorder %s131, %s134
      %p140 = scmp.eq.s32.totalorder %s23, 0
      %p141 = por %p139, %p140
      %p142 = scmp.ne.s32.totalorder %s131, %s134
      %p143 = scmp.eq.s32.totalorder %s28, 3
      %p144 = por %p142, %p143
      %p145 = scmp.ne.s32.totalorder %s134, %s135
      %p146 = scmp.eq.s32.totalorder %s28, 0
      %p147 = por %p145, %p146
      %p148 = scmp.ne.s32.totalorder %s134, %s135
      %p149 = scmp.eq.s32.totalorder %s29, 3
      %p150 = por %p148, %p149
      %p152 = scmp.ne.s32.totalorder %s135, %s151
      %p153 = scmp.eq.s32.totalorder %s29, 0
      %p154 = por %p152, %p153
      %s155 = ssub.s32 %s30, %s42
      %s156 = ssub.s32 %s31, %s38
      %s157 = sor.u32 %s155, %s156
      %p158 = scmp.eq.s32.totalorder %s157, 0
      %s160 = sadd.s32 %s159, 1
      %s161 = scalar_select %p158, %s159, %s160
      %p164 = pneg %p158
      %p165 = scmp.eq.s32.totalorder %s23, 3
      %p166 = por %p164, %p165
      %p167 = scmp.ne.s32.totalorder %s159, %s162
      %p168 = scmp.eq.s32.totalorder %s23, 0
      %p169 = por %p167, %p168
      %p170 = scmp.ne.s32.totalorder %s159, %s162
      %p171 = scmp.eq.s32.totalorder %s28, 3
      %p172 = por %p170, %p171
      %p173 = scmp.ne.s32.totalorder %s162, %s163
      %p174 = scmp.eq.s32.totalorder %s28, 0
      %p175 = por %p173, %p174
      %p176 = scmp.ne.s32.totalorder %s162, %s163
      %p177 = scmp.eq.s32.totalorder %s29, 3
      %p178 = por %p176, %p177
      %p180 = scmp.ne.s32.totalorder %s163, %s179
      %p181 = scmp.eq.s32.totalorder %s29, 0
      %p182 = por %p180, %p181
      %p183 = scmp.le.s32.totalorder 1, %s23
      %p184 = scmp.lt.s32.totalorder %s23, 5
      %p185 = pnand %p183, %p184
      %p186 = pneg %p185
      // Predicated region
      $region9: #{model_forward.1} parent=5 // pred_check
        _
      $region10: #{model_forward.1} parent=5 // pred_check_branch
        %188 = sbr.rel (%p185) target = $region12
      $region11: #{model_forward.1} parent=5 // pred_region
        %s189 = ssub.s32 %s23, 1
      $region12: #{model_forward.1} parent=5 // pred_fallthru
        _
      %p190 = scmp.lt.s32.totalorder %s23, 4
      // Predicated region
      $region13: #{model_forward.1} parent=5 // pred_check
        %p191 = pneg %p190
      $region14: #{model_forward.1} parent=5 // pred_check_branch
        %193 = sbr.rel (%p191) target = $region16
      $region15: #{model_forward.1} parent=5 // pred_region
        // Predicated region
        $region17: #{model_forward.1} parent=15 // pred_check
          %p194 = pneg %p57
        $region18: #{model_forward.1} parent=15 // pred_check_branch
          %196 = sbr.rel (%p194) target = $region20
        $region19: #{model_forward.1} parent=15 // pred_region
          #allocation12 [shape = 'u32[6]{0}', space=smem, size = 0x18, scoped, tag = 'DMA stride descriptor']
          %s197 = sand.u32 %s47, 1
          %s198 = scalar_lea.sflag [#allocation3], %s197
          %s199 = sand.u32 %s47, 1
          %s200 = smul.addr %s199, 384
          %s201 = scalar_lea.vmem [#allocation2], %s200
          %s202 = smul.u32 8, %s31
          %s204 = ssub.s32 6144, 6144
          %205 = vsyncadd %s198, %s204
          %s206 = smul.addr %s202, 2
          %s207 = smul.addr %s30, 96
          %s208 = sadd.s32 %s206, %s207
          %s209 = smul.addr %s208, 128
          %s210 = scalar_lea.hbm %s0, %s209
          %s212 = sshll.u32 1, 14
          %s213 = sxor.u32 4294967295, %s212
          %s215 = sld [smem:[#allocation0]]
          %s216 = sadd.s32 2, %s215
          %s218 = sshll.u32 7, 26
          %s219 = sxor.u32 4294967295, %s218
          %s220 = sand.u32 0, %s219
          %s221 = sshll.u32 %s216, 26
          %s222 = sor.u32 %s220, %s221
          %s223 = sshll.u32 %s201, 4
          %s224 = int_to_ptr.vmem [resolvable:$true] %s223
          %230 = sst [smem:[#allocation12]] 4096
          %s231 = scalar_lea.smem [#allocation12], 1
          %232 = sst [smem:[%s231]] 2048
          %s233 = scalar_lea.smem [#allocation12], 2
          %234 = sst [smem:[%s233]] 8
          %s235 = scalar_lea.smem [#allocation12], 3
          %236 = sst [smem:[%s235]] 256
          %s237 = scalar_lea.smem [#allocation12], 4
          %238 = sst [smem:[%s237]] 256
          %s239 = scalar_lea.smem [#allocation12], 5
          %240 = sst [smem:[%s239]] 16
          %242 = dma.general %s210, 6144, %s224, %s198, 131072, [#allocation12], %s222, 0
        $region20: #{model_forward.1} parent=15 // pred_fallthru
          _
      $region16: #{model_forward.1} parent=5 // pred_fallthru
        _
      %p243 = scmp.le.s32.totalorder 1, %s23
      %p244 = scmp.lt.s32.totalorder %s23, 5
      %p245 = pnand %p243, %p244
      %p246 = pneg %p245
      // Predicated region
      $region21: #{model_forward.1} parent=5 // pred_check
        _
      $region22: #{model_forward.1} parent=5 // pred_check_branch
        %248 = sbr.rel (%p245) target = $region24
      $region23: #{model_forward.1} parent=5 // pred_region
        %s249 = ssub.s32 %s23, 1
        %s250 = sand.u32 %s50, 1
        %s251 = scalar_lea.sflag [#allocation3], %s250
        %s252 = sand.u32 %s50, 1
        %s253 = smul.addr %s252, 384
        %s254 = scalar_lea.vmem [#allocation2], %s253
        // Predicated region
        $region25: #{model_forward.1} parent=23 // pred_check
          %p255 = pneg %p63
        $region26: #{model_forward.1} parent=23 // pred_check_branch
          %257 = sbr.rel (%p255) target = $region28
        $region27: #{model_forward.1} parent=23 // pred_region
          %258 = dma.done %s251, 6144
        $region28: #{model_forward.1} parent=23 // pred_fallthru
          _
        %s259 = sand.u32 %s50, 1
        %s260 = scalar_lea.sflag [#allocation3], %s259
        %s261 = sand.u32 %s50, 1
        %s262 = smul.addr %s261, 384
        %s263 = scalar_lea.vmem [#allocation2], %s262
        %p264 = pneg %p63
        %p265 = pneg %p60
        %p266 = pneg %p91
        %p267 = pneg %p88
        %s268 = sand.u32 %s78, 1
        %s269 = scalar_lea.sflag [#allocation4], %s268
        %s270 = sand.u32 %s78, 1
        %s271 = smul.addr %s270, 384
        %s272 = scalar_lea.vmem [#allocation5], %s271
        %p273 = pneg %p119
        %p274 = pneg %p116
        %s275 = sand.u32 %s28, 1
        %s276 = scalar_lea.sflag [#allocation7], %s275
        %s277 = sand.u32 %s106, 1
        %s278 = smul.addr %s277, 128
        %s279 = scalar_lea.vmem [#allocation6], %s278
        %p280 = pneg %p147
        %p281 = pneg %p144
        %s282 = sand.u32 %s28, 1
        %s283 = scalar_lea.sflag [#allocation7], %s282
        %s284 = sand.u32 %s134, 1
        %s285 = smul.addr %s284, 128
        %s286 = scalar_lea.vmem [#allocation8], %s285
        %p287 = pneg %p175
        %p288 = pneg %p172
        %s289 = sand.u32 %s162, 1
        %s290 = scalar_lea.sflag [#allocation10], %s289
        %s291 = sand.u32 %s162, 1
        %s292 = smul.addr %s291, 128
        %s293 = scalar_lea.vmem [#allocation9], %s292
        %s294 = smul.u32 8, %s33
        %s295 = smul.u32 8, %s33
        %s296 = smul.u32 8, %s33
        %s297 = smul.u32 8, %s33
        %s298 = smul.u32 8, %s33
        %v299 = vld [vmem:[%s254] sm:$0xff]
        %v300 = vld [vmem:[%s254 + $0x8] sm:$0xff]
        %v301 = vld [vmem:[%s254 + $0x10] sm:$0xff]
        %v302 = vld [vmem:[%s254 + $0x18] sm:$0xff]
        %v303 = vld [vmem:[%s254 + $0x20] sm:$0xff]
        %v304 = vld [vmem:[%s254 + $0x28] sm:$0xff]
        %v305 = vld [vmem:[%s254 + $0x30] sm:$0xff]
        %v306 = vld [vmem:[%s254 + $0x38] sm:$0xff]
        %v307 = vld [vmem:[%s254 + $0x40] sm:$0xff]
        %v308 = vld [vmem:[%s254 + $0x48] sm:$0xff]
        %v309 = vld [vmem:[%s254 + $0x50] sm:$0xff]
        %v310 = vld [vmem:[%s254 + $0x58] sm:$0xff]
        %v311 = vld [vmem:[%s254 + $0x60] sm:$0xff]
        %v312 = vld [vmem:[%s254 + $0x68] sm:$0xff]
        %v313 = vld [vmem:[%s254 + $0x70] sm:$0xff]
        %v314 = vld [vmem:[%s254 + $0x78] sm:$0xff]
        %v315 = vld [vmem:[%s254 + $0x80] sm:$0xff]
        %v316 = vld [vmem:[%s254 + $0x88] sm:$0xff]
        %v317 = vld [vmem:[%s254 + $0x90] sm:$0xff]
        %v318 = vld [vmem:[%s254 + $0x98] sm:$0xff]
        %v319 = vld [vmem:[%s254 + $0xa0] sm:$0xff]
        %v320 = vld [vmem:[%s254 + $0xa8] sm:$0xff]
        %v321 = vld [vmem:[%s254 + $0xb0] sm:$0xff]
        %v322 = vld [vmem:[%s254 + $0xb8] sm:$0xff]
        %v323 = vld [vmem:[%s254 + $0xc0] sm:$0xff]
        %v324 = vld [vmem:[%s254 + $0xc8] sm:$0xff]
        %v325 = vld [vmem:[%s254 + $0xd0] sm:$0xff]
        %v326 = vld [vmem:[%s254 + $0xd8] sm:$0xff]
        %v327 = vld [vmem:[%s254 + $0xe0] sm:$0xff]
        %v328 = vld [vmem:[%s254 + $0xe8] sm:$0xff]
        %v329 = vld [vmem:[%s254 + $0xf0] sm:$0xff]
        %v330 = vld [vmem:[%s254 + $0xf8] sm:$0xff]
        %v331 = vld [vmem:[%s254 + $0x100] sm:$0xff]
        %v332 = vld [vmem:[%s254 + $0x108] sm:$0xff]
        %v333 = vld [vmem:[%s254 + $0x110] sm:$0xff]
        %v334 = vld [vmem:[%s254 + $0x118] sm:$0xff]
        %v335 = vld [vmem:[%s254 + $0x120] sm:$0xff]
        %v336 = vld [vmem:[%s254 + $0x128] sm:$0xff]
        %v337 = vld [vmem:[%s254 + $0x130] sm:$0xff]
        %v338 = vld [vmem:[%s254 + $0x138] sm:$0xff]
        %v339 = vld [vmem:[%s254 + $0x140] sm:$0xff]
        %v340 = vld [vmem:[%s254 + $0x148] sm:$0xff]
        %v341 = vld [vmem:[%s254 + $0x150] sm:$0xff]
        %v342 = vld [vmem:[%s254 + $0x158] sm:$0xff]
        %v343 = vld [vmem:[%s254 + $0x160] sm:$0xff]
        %v344 = vld [vmem:[%s254 + $0x168] sm:$0xff]
        %v345 = vld [vmem:[%s254 + $0x170] sm:$0xff]
        %v346 = vld [vmem:[%s254 + $0x178] sm:$0xff]
        %v347 = vadd.f32 %v299, %v299
        %v348 = vadd.f32 %v300, %v300
        %v349 = vadd.f32 %v301, %v301
        %v350 = vadd.f32 %v302, %v302
        %v351 = vadd.f32 %v303, %v303
        %v352 = vadd.f32 %v304, %v304
        %v353 = vadd.f32 %v305, %v305
        %v354 = vadd.f32 %v306, %v306
        %v355 = vadd.f32 %v307, %v307
        %v356 = vadd.f32 %v308, %v308
        %v357 = vadd.f32 %v309, %v309
        %v358 = vadd.f32 %v310, %v310
        %v359 = vadd.f32 %v311, %v311
        %v360 = vadd.f32 %v312, %v312
        %v361 = vadd.f32 %v313, %v313
        %v362 = vadd.f32 %v314, %v314
        %v363 = vadd.f32 %v315, %v315
        %v364 = vadd.f32 %v316, %v316
        %v365 = vadd.f32 %v317, %v317
        %v366 = vadd.f32 %v318, %v318
        %v367 = vadd.f32 %v319, %v319
        %v368 = vadd.f32 %v320, %v320
        %v369 = vadd.f32 %v321, %v321
        %v370 = vadd.f32 %v322, %v322
        %v371 = vadd.f32 %v323, %v323
        %v372 = vadd.f32 %v324, %v324
        %v373 = vadd.f32 %v325, %v325
        %v374 = vadd.f32 %v326, %v326
        %v375 = vadd.f32 %v327, %v327
        %v376 = vadd.f32 %v328, %v328
        %v377 = vadd.f32 %v329, %v329
        %v378 = vadd.f32 %v330, %v330
        %v379 = vadd.f32 %v331, %v331
        %v380 = vadd.f32 %v332, %v332
        %v381 = vadd.f32 %v333, %v333
        %v382 = vadd.f32 %v334, %v334
        %v383 = vadd.f32 %v335, %v335
        %v384 = vadd.f32 %v336, %v336
        %v385 = vadd.f32 %v337, %v337
        %v386 = vadd.f32 %v338, %v338
        %v387 = vadd.f32 %v339, %v339
        %v388 = vadd.f32 %v340, %v340
        %v389 = vadd.f32 %v341, %v341
        %v390 = vadd.f32 %v342, %v342
        %v391 = vadd.f32 %v343, %v343
        %v392 = vadd.f32 %v344, %v344
        %v393 = vadd.f32 %v345, %v345
        %v394 = vadd.f32 %v346, %v346
        %395 = vst [vmem:[%s272] sm:$0xff] %v347
        %396 = vst [vmem:[%s272 + $0x8] sm:$0xff] %v348
        %397 = vst [vmem:[%s272 + $0x10] sm:$0xff] %v349
        %398 = vst [vmem:[%s272 + $0x18] sm:$0xff] %v350
        %399 = vst [vmem:[%s272 + $0x20] sm:$0xff] %v351
        %400 = vst [vmem:[%s272 + $0x28] sm:$0xff] %v352
        %401 = vst [vmem:[%s272 + $0x30] sm:$0xff] %v353
        %402 = vst [vmem:[%s272 + $0x38] sm:$0xff] %v354
        %403 = vst [vmem:[%s272 + $0x40] sm:$0xff] %v355
        %404 = vst [vmem:[%s272 + $0x48] sm:$0xff] %v356
        %405 = vst [vmem:[%s272 + $0x50] sm:$0xff] %v357
        %406 = vst [vmem:[%s272 + $0x58] sm:$0xff] %v358
        %407 = vst [vmem:[%s272 + $0x60] sm:$0xff] %v359
        %408 = vst [vmem:[%s272 + $0x68] sm:$0xff] %v360
        %409 = vst [vmem:[%s272 + $0x70] sm:$0xff] %v361
        %410 = vst [vmem:[%s272 + $0x78] sm:$0xff] %v362
        %411 = vst [vmem:[%s272 + $0x80] sm:$0xff] %v363
        %412 = vst [vmem:[%s272 + $0x88] sm:$0xff] %v364
        %413 = vst [vmem:[%s272 + $0x90] sm:$0xff] %v365
        %414 = vst [vmem:[%s272 + $0x98] sm:$0xff] %v366
        %415 = vst [vmem:[%s272 + $0xa0] sm:$0xff] %v367
        %416 = vst [vmem:[%s272 + $0xa8] sm:$0xff] %v368
        %417 = vst [vmem:[%s272 + $0xb0] sm:$0xff] %v369
        %418 = vst [vmem:[%s272 + $0xb8] sm:$0xff] %v370
        %419 = vst [vmem:[%s272 + $0xc0] sm:$0xff] %v371
        %420 = vst [vmem:[%s272 + $0xc8] sm:$0xff] %v372
        %421 = vst [vmem:[%s272 + $0xd0] sm:$0xff] %v373
        %422 = vst [vmem:[%s272 + $0xd8] sm:$0xff] %v374
        %423 = vst [vmem:[%s272 + $0xe0] sm:$0xff] %v375
        %424 = vst [vmem:[%s272 + $0xe8] sm:$0xff] %v376
        %425 = vst [vmem:[%s272 + $0xf0] sm:$0xff] %v377
        %426 = vst [vmem:[%s272 + $0xf8] sm:$0xff] %v378
        %427 = vst [vmem:[%s272 + $0x100] sm:$0xff] %v379
        %428 = vst [vmem:[%s272 + $0x108] sm:$0xff] %v380
        %429 = vst [vmem:[%s272 + $0x110] sm:$0xff] %v381
        %430 = vst [vmem:[%s272 + $0x118] sm:$0xff] %v382
        %431 = vst [vmem:[%s272 + $0x120] sm:$0xff] %v383
        %432 = vst [vmem:[%s272 + $0x128] sm:$0xff] %v384
        %433 = vst [vmem:[%s272 + $0x130] sm:$0xff] %v385
        %434 = vst [vmem:[%s272 + $0x138] sm:$0xff] %v386
        %435 = vst [vmem:[%s272 + $0x140] sm:$0xff] %v387
        %436 = vst [vmem:[%s272 + $0x148] sm:$0xff] %v388
        %437 = vst [vmem:[%s272 + $0x150] sm:$0xff] %v389
        %438 = vst [vmem:[%s272 + $0x158] sm:$0xff] %v390
        %439 = vst [vmem:[%s272 + $0x160] sm:$0xff] %v391
        %440 = vst [vmem:[%s272 + $0x168] sm:$0xff] %v392
        %441 = vst [vmem:[%s272 + $0x170] sm:$0xff] %v393
        %442 = vst [vmem:[%s272 + $0x178] sm:$0xff] %v394
        %443 = vst [vmem:[%s279] sm:$0xff] %v299
        %444 = vst [vmem:[%s279 + $0x8] sm:$0xff] %v300
        %445 = vst [vmem:[%s279 + $0x10] sm:$0xff] %v301
        %446 = vst [vmem:[%s279 + $0x18] sm:$0xff] %v302
        %447 = vst [vmem:[%s279 + $0x20] sm:$0xff] %v303
        %448 = vst [vmem:[%s279 + $0x28] sm:$0xff] %v304
        %449 = vst [vmem:[%s279 + $0x30] sm:$0xff] %v305
        %450 = vst [vmem:[%s279 + $0x38] sm:$0xff] %v306
        %451 = vst [vmem:[%s279 + $0x40] sm:$0xff] %v307
        %452 = vst [vmem:[%s279 + $0x48] sm:$0xff] %v308
        %453 = vst [vmem:[%s279 + $0x50] sm:$0xff] %v309
        %454 = vst [vmem:[%s279 + $0x58] sm:$0xff] %v310
        %455 = vst [vmem:[%s279 + $0x60] sm:$0xff] %v311
        %456 = vst [vmem:[%s279 + $0x68] sm:$0xff] %v312
        %457 = vst [vmem:[%s279 + $0x70] sm:$0xff] %v313
        %458 = vst [vmem:[%s279 + $0x78] sm:$0xff] %v314
        %459 = vst [vmem:[%s286] sm:$0xff] %v315
        %460 = vst [vmem:[%s286 + $0x8] sm:$0xff] %v316
        %461 = vst [vmem:[%s286 + $0x10] sm:$0xff] %v317
        %462 = vst [vmem:[%s286 + $0x18] sm:$0xff] %v318
        %463 = vst [vmem:[%s286 + $0x20] sm:$0xff] %v319
        %464 = vst [vmem:[%s286 + $0x28] sm:$0xff] %v320
        %465 = vst [vmem:[%s286 + $0x30] sm:$0xff] %v321
        %466 = vst [vmem:[%s286 + $0x38] sm:$0xff] %v322
        %467 = vst [vmem:[%s286 + $0x40] sm:$0xff] %v323
        %468 = vst [vmem:[%s286 + $0x48] sm:$0xff] %v324
        %469 = vst [vmem:[%s286 + $0x50] sm:$0xff] %v325
        %470 = vst [vmem:[%s286 + $0x58] sm:$0xff] %v326
        %471 = vst [vmem:[%s286 + $0x60] sm:$0xff] %v327
        %472 = vst [vmem:[%s286 + $0x68] sm:$0xff] %v328
        %473 = vst [vmem:[%s286 + $0x70] sm:$0xff] %v329
        %474 = vst [vmem:[%s286 + $0x78] sm:$0xff] %v330
        %475 = vst [vmem:[%s293] sm:$0xff] %v331
        %476 = vst [vmem:[%s293 + $0x8] sm:$0xff] %v332
        %477 = vst [vmem:[%s293 + $0x10] sm:$0xff] %v333
        %478 = vst [vmem:[%s293 + $0x18] sm:$0xff] %v334
        %479 = vst [vmem:[%s293 + $0x20] sm:$0xff] %v335
        %480 = vst [vmem:[%s293 + $0x28] sm:$0xff] %v336
        %481 = vst [vmem:[%s293 + $0x30] sm:$0xff] %v337
        %482 = vst [vmem:[%s293 + $0x38] sm:$0xff] %v338
        %483 = vst [vmem:[%s293 + $0x40] sm:$0xff] %v339
        %484 = vst [vmem:[%s293 + $0x48] sm:$0xff] %v340
        %485 = vst [vmem:[%s293 + $0x50] sm:$0xff] %v341
        %486 = vst [vmem:[%s293 + $0x58] sm:$0xff] %v342
        %487 = vst [vmem:[%s293 + $0x60] sm:$0xff] %v343
        %488 = vst [vmem:[%s293 + $0x68] sm:$0xff] %v344
        %489 = vst [vmem:[%s293 + $0x70] sm:$0xff] %v345
        %490 = vst [vmem:[%s293 + $0x78] sm:$0xff] %v346
        %s491 = sand.u32 %s78, 1
        %s492 = scalar_lea.sflag [#allocation4], %s491
        %s493 = sand.u32 %s78, 1
        %s494 = smul.addr %s493, 384
        %s495 = scalar_lea.vmem [#allocation5], %s494
        %s496 = sand.u32 %s28, 1
        %s497 = scalar_lea.sflag [#allocation7], %s496
        %s498 = sand.u32 %s106, 1
        %s499 = smul.addr %s498, 128
        %s500 = scalar_lea.vmem [#allocation6], %s499
        %s501 = sand.u32 %s28, 1
        %s502 = scalar_lea.sflag [#allocation7], %s501
        %s503 = sand.u32 %s134, 1
        %s504 = smul.addr %s503, 128
        %s505 = scalar_lea.vmem [#allocation8], %s504
        %s506 = sand.u32 %s162, 1
        %s507 = scalar_lea.sflag [#allocation10], %s506
        %s508 = sand.u32 %s162, 1
        %s509 = smul.addr %s508, 128
        %s510 = scalar_lea.vmem [#allocation9], %s509
        // Predicated region
        $region29: #{model_forward.1} parent=23 // pred_check
          %p511 = pneg %p88
        $region30: #{model_forward.1} parent=23 // pred_check_branch
          %513 = sbr.rel (%p511) target = $region32
        $region31: #{model_forward.1} parent=23 // pred_region
          #allocation14 [shape = 'u32[6]{0}', space=smem, size = 0x18, scoped, tag = 'DMA stride descriptor']
          %s514 = smul.u32 8, %s33
          %s516 = ssub.s32 6144, 6144
          %517 = vsyncadd %s492, %s516
          %s518 = smul.addr %s514, 2
          %s519 = smul.addr %s32, 96
          %s520 = sadd.s32 %s518, %s519
          %s521 = smul.addr %s520, 128
          %s522 = scalar_lea.hbm %s1, %s521
          %s524 = sshll.u32 1, 14
          %s525 = sxor.u32 4294967295, %s524
          %s528 = sshll.u32 7, 18
          %s529 = sxor.u32 4294967295, %s528
          %s530 = sand.u32 0, %s529
          %s532 = sor.u32 %s530, 0
          %s533 = sshll.u32 %s495, 4
          %s534 = int_to_ptr.vmem [resolvable:$true] %s533
          %540 = sst [smem:[#allocation14]] 2048
          %s541 = scalar_lea.smem [#allocation14], 1
          %542 = sst [smem:[%s541]] 4096
          %s543 = scalar_lea.smem [#allocation14], 2
          %544 = sst [smem:[%s543]] 8
          %s545 = scalar_lea.smem [#allocation14], 3
          %546 = sst [smem:[%s545]] 256
          %s547 = scalar_lea.smem [#allocation14], 4
          %548 = sst [smem:[%s547]] 256
          %s549 = scalar_lea.smem [#allocation14], 5
          %550 = sst [smem:[%s549]] 16
          %552 = dma.general %s534, 6144, %s522, %s492, 131072, [#allocation14], %s532, 0
        $region32: #{model_forward.1} parent=23 // pred_fallthru
          _
        // Predicated region
        $region33: #{model_forward.1} parent=23 // pred_check
          %p553 = pneg %p116
        $region34: #{model_forward.1} parent=23 // pred_check_branch
          %555 = sbr.rel (%p553) target = $region36
        $region35: #{model_forward.1} parent=23 // pred_region
          %s556 = smul.u32 8, %s33
          %s558 = ssub.s32 2048, 2048
          %559 = vsyncadd %s497, %s558
          %s560 = smul.addr %s556, 2
          %s561 = smul.addr %s32, 32
          %s562 = sadd.s32 %s560, %s561
          %s563 = smul.addr %s562, 128
          %s564 = scalar_lea.hbm %s2, %s563
          %s565 = sshll.u32 %s500, 4
          %s566 = int_to_ptr.vmem [resolvable:$true] %s565
          %571 = dma.vmem_to_hbm [thread:$0]  %s566, 2048, %s564, %s497, 256, 256, 16
        $region36: #{model_forward.1} parent=23 // pred_fallthru
          _
        // Predicated region
        $region37: #{model_forward.1} parent=23 // pred_check
          %p572 = pneg %p144
        $region38: #{model_forward.1} parent=23 // pred_check_branch
          %574 = sbr.rel (%p572) target = $region40
        $region39: #{model_forward.1} parent=23 // pred_region
          %s575 = smul.u32 8, %s33
          %s577 = ssub.s32 2048, 2048
          %578 = vsyncadd %s502, %s577
          %s579 = smul.addr %s575, 2
          %s580 = smul.addr %s32, 32
          %s581 = sadd.s32 %s579, %s580
          %s582 = smul.addr %s581, 128
          %s583 = scalar_lea.hbm %s3, %s582
          %s584 = sshll.u32 %s505, 4
          %s585 = int_to_ptr.vmem [resolvable:$true] %s584
          %590 = dma.vmem_to_hbm [thread:$0]  %s585, 2048, %s583, %s502, 256, 256, 16
        $region40: #{model_forward.1} parent=23 // pred_fallthru
          _
        // Predicated region
        $region41: #{model_forward.1} parent=23 // pred_check
          %p591 = pneg %p172
        $region42: #{model_forward.1} parent=23 // pred_check_branch
          %593 = sbr.rel (%p591) target = $region44
        $region43: #{model_forward.1} parent=23 // pred_region
          %s594 = smul.u32 8, %s33
          %s596 = ssub.s32 2048, 2048
          %597 = vsyncadd %s507, %s596
          %s598 = smul.addr %s594, 2
          %s599 = smul.addr %s32, 32
          %s600 = sadd.s32 %s598, %s599
          %s601 = smul.addr %s600, 128
          %s602 = scalar_lea.hbm %s4, %s601
          %s603 = sshll.u32 %s510, 4
          %s604 = int_to_ptr.vmem [resolvable:$true] %s603
          %609 = dma.vmem_to_hbm [thread:$0]  %s604, 2048, %s602, %s507, 256, 256, 16
        $region44: #{model_forward.1} parent=23 // pred_fallthru
          _
      $region24: #{model_forward.1} parent=5 // pred_fallthru
        _
      %p610 = scmp.le.s32.totalorder 2, %s23
      // Predicated region
      $region45: #{model_forward.1} parent=5 // pred_check
        %p611 = pneg %p610
      $region46: #{model_forward.1} parent=5 // pred_check_branch
        %613 = sbr.rel (%p611) target = $region48
      $region47: #{model_forward.1} parent=5 // pred_region
        %s614 = ssub.s32 %s23, 2
        // Predicated region
        $region49: #{model_forward.1} parent=47 // pred_check
          %p615 = pneg %p94
        $region50: #{model_forward.1} parent=47 // pred_check_branch
          %617 = sbr.rel (%p615) target = $region52
        $region51: #{model_forward.1} parent=47 // pred_region
          %s618 = sand.u32 %s79, 1
          %s619 = scalar_lea.sflag [#allocation4], %s618
          %s620 = sand.u32 %s79, 1
          %s621 = smul.addr %s620, 384
          %s622 = scalar_lea.vmem [#allocation5], %s621
          %623 = dma.done %s619, 6144
        $region52: #{model_forward.1} parent=47 // pred_fallthru
          _
        // Predicated region
        $region53: #{model_forward.1} parent=47 // pred_check
          %p624 = pneg %p122
        $region54: #{model_forward.1} parent=47 // pred_check_branch
          %626 = sbr.rel (%p624) target = $region56
        $region55: #{model_forward.1} parent=47 // pred_region
          %s627 = sand.u32 %s29, 1
          %s628 = scalar_lea.sflag [#allocation7], %s627
          %s629 = sand.u32 %s107, 1
          %s630 = smul.addr %s629, 128
          %s631 = scalar_lea.vmem [#allocation6], %s630
          %632 = dma.done %s628, 2048
        $region56: #{model_forward.1} parent=47 // pred_fallthru
          _
        // Predicated region
        $region57: #{model_forward.1} parent=47 // pred_check
          %p633 = pneg %p150
        $region58: #{model_forward.1} parent=47 // pred_check_branch
          %635 = sbr.rel (%p633) target = $region60
        $region59: #{model_forward.1} parent=47 // pred_region
          %s636 = sand.u32 %s29, 1
          %s637 = scalar_lea.sflag [#allocation7], %s636
          %s638 = sand.u32 %s135, 1
          %s639 = smul.addr %s638, 128
          %s640 = scalar_lea.vmem [#allocation8], %s639
          %641 = dma.done %s637, 2048
        $region60: #{model_forward.1} parent=47 // pred_fallthru
          _
        // Predicated region
        $region61: #{model_forward.1} parent=47 // pred_check
          %p642 = pneg %p178
        $region62: #{model_forward.1} parent=47 // pred_check_branch
          %644 = sbr.rel (%p642) target = $region64
        $region63: #{model_forward.1} parent=47 // pred_region
          %s645 = sand.u32 %s163, 1
          %s646 = scalar_lea.sflag [#allocation10], %s645
          %s647 = sand.u32 %s163, 1
          %s648 = smul.addr %s647, 128
          %s649 = scalar_lea.vmem [#allocation9], %s648
          %650 = dma.done %s646, 2048
        $region64: #{model_forward.1} parent=47 // pred_fallthru
          _
      $region48: #{model_forward.1} parent=5 // pred_fallthru
        _
    $region6: #{model_forward.1} parent=1 // loop_footer
      %s27 = sadd.s32 1, %s23
    $region7: #{model_forward.1} parent=1 // loop_footer_branch
      %22 = sbr.rel target = $region3
    $region8: #{model_forward.1} parent=1 // loop_exit
      _
    %651 = vsyncpa [#allocation3], 1
    %s652 = scalar_lea.sflag [#allocation3], 1
    %653 = vsyncpa %s652, 1
    %654 = vsyncpa [#allocation4], 1
    %s655 = scalar_lea.sflag [#allocation4], 1
    %656 = vsyncpa %s655, 1
    %657 = vsyncpa [#allocation7], 1
    %s658 = scalar_lea.sflag [#allocation7], 1
    %659 = vsyncpa %s658, 1
    %660 = vsyncpa [#allocation10], 1
    %s661 = scalar_lea.sflag [#allocation10], 1
    %662 = vsyncpa %s661, 1

</llo_original>
